<compile_context>
chip_gen: v5e
topology: v5e:2x2
jax: 0.10.0
libtpu: 0.0.40
codegen_flags: <defaults>
</compile_context>

<pallas_src>
import math

import jax
import jax.numpy as jnp
from jax.experimental import pallas as pl
from jax.experimental.pallas import tpu as pltpu

_LANE = 128            # lane width: last block dim is a multiple of this (or full extent)
_BLOCK_ROWS = 2048     # rows per grid step in the (rows, 128) view -> 1 MiB f32 per field
_FLAT_TILE = 32768     # lane elements per grid step in the (1, N) fallback view


def _sum_energies_kernel(*refs):
    """refs = (field_0, ..., field_{F-1}, out); all share one block shape."""
    out_ref = refs[-1]
    in_refs = refs[:-1]
    acc = in_refs[0][...].astype(out_ref.dtype)      # init from field 0
    for r in in_refs[1:]:                            # unrolled VPU adds
        acc = acc + r[...].astype(out_ref.dtype)
    out_ref[...] = acc


def sum_energies(fields, like):
    """Elementwise sum of `fields`; result has `like`'s shape and dtype."""
    out_shape = like.shape
    out_dtype = like.dtype
    if not fields:
        return jnp.zeros(out_shape, out_dtype)

    n = int(math.prod(out_shape)) if out_shape else 1
    if n == 0:
        return jnp.zeros(out_shape, out_dtype)

    # TODO(synk): PyTorch's `total += field` would broadcast differently-shaped
    # fields; this implementation requires every field to match `like`'s size.

    # Free row-major re-views of the original HBM buffers (no stack, no pad).
    if n % _LANE == 0:
        rows = n // _LANE
        view_shape = (rows, _LANE)                   # sublane- & lane-dense
        if rows <= _BLOCK_ROWS:
            grid, block, index_map = (), view_shape, None
        else:
            grid = (pl.cdiv(rows, _BLOCK_ROWS),)     # >= 2 steps by construction
            block = (_BLOCK_ROWS, _LANE)
            index_map = lambda i: (i, 0)
    else:
        view_shape = (1, n)                          # lane-dense fallback
        if n <= _FLAT_TILE:
            grid, block, index_map = (), view_shape, None
        else:
            grid = (pl.cdiv(n, _FLAT_TILE),)
            block = (1, _FLAT_TILE)
            index_map = lambda i: (0, i)

    views = [jnp.reshape(f, view_shape) for f in fields]

    if grid:
        spec = pl.BlockSpec(block, index_map)
        extra = dict(compiler_params=pltpu.CompilerParams(
            dimension_semantics=("parallel",)))
    else:
        spec = pl.BlockSpec(block, lambda: (0,) * len(block))
        extra = {}

    out2d = pl.pallas_call(
        _sum_energies_kernel,
        out_shape=jax.ShapeDtypeStruct(view_shape, out_dtype),
        grid=grid,
        in_specs=[spec] * len(views),
        out_specs=spec,
        **extra,
    )(*views)

    return jnp.reshape(out2d, out_shape)


class SumEnergiesJAX:
    """Dict-in/dict-out wrapper matching the PyTorch module's forward pass."""

    def __init__(self, input_fields, out_field="total_energy"):
        self.input_fields = list(input_fields)
        self.out_field = out_field

    def __call__(self, data):
        data = dict(data)
        like = data[self.out_field]        # zeros_like target: shape & dtype
        data[self.out_field] = sum_energies(
            [data[f] for f in self.input_fields], like=like)
        return data


def _make_data(key, input_fields, num_graphs, salt):
    data = {}
    for i, name in enumerate(input_fields):
        k = jax.random.fold_in(key, salt + i)
        data[name] = jax.random.normal(k, (num_graphs, 1), dtype=jnp.float32)
    data["total_energy"] = jnp.full((num_graphs, 1), 123.0, dtype=jnp.float32)
    return data


def _check(module, data, input_fields):
    out = module(data)
    result = jax.block_until_ready(out["total_energy"])
    ref = sum(data[f] for f in input_fields)
    assert result.shape == data["total_energy"].shape
    assert result.dtype == data["total_energy"].dtype
    assert jnp.allclose(result, ref, atol=1e-5), "mismatch vs reference"


if __name__ == "__main__":
    key = jax.random.PRNGKey(0)
    input_fields = ["atomic_energy_sum", "electrostatic_energy",
                    "dispersion_energy"]
    module = SumEnergiesJAX(input_fields, out_field="total_energy")

    # Small per-graph case (typical): N=8 -> (1, N) view, single block.
    _check(module, _make_data(key, input_fields, 8, salt=0), input_fields)

    # N multiple of 128, single dense block: N = 300*128 = 38400.
    _check(module, _make_data(key, input_fields, 38400, salt=100), input_fields)

    # N multiple of 128, tiled dense path with masked boundary block:
    # N = 4100*128 = 524800 rows=4100 -> grid=3 (last block partial).
    _check(module, _make_data(key, input_fields, 524800, salt=200), input_fields)

    # N not a multiple of 128 and > _FLAT_TILE: lane-dense tiled fallback.
    _check(module, _make_data(key, input_fields, 70000, salt=300), input_fields)

    print("KERNEL_OK")
</pallas_src>

<mosaic_0001>
module attributes {stable_mosaic.version = 11 : i64} {
  func.func @_sum_energies_kernel(%arg0: memref<1x8xf32, #tpu.memory_space<vmem>>, %arg1: memref<1x8xf32, #tpu.memory_space<vmem>>, %arg2: memref<1x8xf32, #tpu.memory_space<vmem>>, %arg3: memref<1x8xf32, #tpu.memory_space<vmem>>) attributes {dimension_semantics = [], scalar_prefetch = 0 : i64, scratch_operands = 0 : i64, tpu.core_type = #tpu.core_type<tc>} {
    %c0 = arith.constant 0 : index
    %c0_0 = arith.constant 0 : index
    %0 = vector.load %arg0[%c0, %c0_0] : memref<1x8xf32, #tpu.memory_space<vmem>>, vector<1x8xf32>
    %c0_1 = arith.constant 0 : index
    %c0_2 = arith.constant 0 : index
    %1 = vector.load %arg1[%c0_1, %c0_2] : memref<1x8xf32, #tpu.memory_space<vmem>>, vector<1x8xf32>
    %2 = arith.addf %0, %1 : vector<1x8xf32>
    %c0_3 = arith.constant 0 : index
    %c0_4 = arith.constant 0 : index
    %3 = vector.load %arg2[%c0_3, %c0_4] : memref<1x8xf32, #tpu.memory_space<vmem>>, vector<1x8xf32>
    %4 = arith.addf %2, %3 : vector<1x8xf32>
    %c0_5 = arith.constant 0 : index
    %c0_6 = arith.constant 0 : index
    %5 = vector.load %arg3[%c0_5, %c0_6] : memref<1x8xf32, #tpu.memory_space<vmem>>, vector<1x8xf32>
    tpu.vector_store %arg3[%c0_5, %c0_6], %4 {strides = array<i32>} : memref<1x8xf32, #tpu.memory_space<vmem>>, vector<1x8xf32>,
    return
  }
}

</mosaic_0001>

<llo_original>
// kernel: tpu_custom_call.1
$region0: #{tpu_custom_call.1}
  #allocation0 [shape = 'u32[]', space=smem, size = 0x4, offset = 0x4, fixed_abs, tag = 'smem constant byte address 0x4 - core index']
  #allocation1 [shape = 'u32[72,128]{1,0:T(1,128)}', space=vmem, size = 0x9000, scoped, tag = 'internal scratch']
  %s0 = inlined_call_operand.hbm [shape: f32[1,8], index: 0, kind: input, shape index: {}]
  %s1 = inlined_call_operand.hbm [shape: f32[1,8], index: 1, kind: input, shape index: {}]
  %s2 = inlined_call_operand.vmem [shape: f32[1,8], index: 2, kind: input, shape index: {}]
  %s3 = inlined_call_operand.hbm [shape: f32[1,8], index: 3, kind: output, shape index: {}]
  %s4 = sld [smem:[#allocation0]]
  $region30: #{tpu_custom_call.1} parent=0
    _
  %s6 = ssub.s32 1, %s4
  %s7 = scalar_select 0, %s6, %s4
  $region1: #{tpu_custom_call.1} parent=0
    #allocation2 [shape = 'u8[512]{0}', space=vmem, size = 0x400, scoped, tag = 'input window, operand 0, single buffered']
    #allocation3 [shape = 's32[1]{0}', space=sflag, size = 0x4, scoped, tag = 'scoped memory for tpu_custom_call.1']
    #allocation4 [shape = 's32[1]{0}', space=sflag, size = 0x4, scoped, tag = 'scoped memory for tpu_custom_call.1']
    #allocation5 [shape = 'u8[512]{0}', space=vmem, size = 0x400, scoped, tag = 'input window, operand 1, single buffered']
    #allocation6 [shape = 's32[1]{0}', space=sflag, size = 0x4, scoped, tag = 'scoped memory for tpu_custom_call.1']
    #allocation7 [shape = 'u8[512]{0}', space=vmem, size = 0x400, scoped, tag = 'output window, operand 0, single buffered']
    %8 = vsyncpa [#allocation3], 0
    %9 = vsyncpa [#allocation6], 0
    %10 = vsyncpa [#allocation4], 0
    // Predicated region
    $region2: #{tpu_custom_call.1} parent=1 // pred_check
      _
    $region3: #{tpu_custom_call.1} parent=1 // pred_check_branch
      %12 = sbr.rel (0) target = $region5
    $region4: #{tpu_custom_call.1} parent=1 // pred_region
      %14 = vsyncadd [#allocation3], 0
      %s16 = sshll.u32 %s0, 4
      %s17 = int_to_ptr.hbm [resolvable:$true] %s16
      %s18 = sshll.u32 [#allocation2], 4
      %s19 = int_to_ptr.vmem [resolvable:$true] %s18
      %21 = dma.hbm_to_vmem [thread:$0]  %s17, 16, %s19, [#allocation3]
    $region5: #{tpu_custom_call.1} parent=1 // pred_fallthru
      _
    // Predicated region
    $region6: #{tpu_custom_call.1} parent=1 // pred_check
      _
    $region7: #{tpu_custom_call.1} parent=1 // pred_check_branch
      %23 = sbr.rel (0) target = $region9
    $region8: #{tpu_custom_call.1} parent=1 // pred_region
      %25 = vsyncadd [#allocation6], 0
      %s27 = sshll.u32 %s1, 4
      %s28 = int_to_ptr.hbm [resolvable:$true] %s27
      %s29 = sshll.u32 [#allocation5], 4
      %s30 = int_to_ptr.vmem [resolvable:$true] %s29
      %32 = dma.hbm_to_vmem [thread:$0]  %s28, 16, %s30, [#allocation6]
    $region9: #{tpu_custom_call.1} parent=1 // pred_fallthru
      _
    // Predicated region
    $region10: #{tpu_custom_call.1} parent=1 // pred_check
      _
    $region11: #{tpu_custom_call.1} parent=1 // pred_check_branch
      %34 = sbr.rel (0) target = $region13
    $region12: #{tpu_custom_call.1} parent=1 // pred_region
      _
    $region13: #{tpu_custom_call.1} parent=1 // pred_fallthru
      _
    // Predicated region
    $region14: #{tpu_custom_call.1} parent=1 // pred_check
      _
    $region15: #{tpu_custom_call.1} parent=1 // pred_check_branch
      %36 = sbr.rel (0) target = $region17
    $region16: #{tpu_custom_call.1} parent=1 // pred_region
      %38 = dma.done [#allocation3], 16
    $region17: #{tpu_custom_call.1} parent=1 // pred_fallthru
      _
    // Predicated region
    $region18: #{tpu_custom_call.1} parent=1 // pred_check
      _
    $region19: #{tpu_custom_call.1} parent=1 // pred_check_branch
      %40 = sbr.rel (0) target = $region21
    $region20: #{tpu_custom_call.1} parent=1 // pred_region
      %42 = dma.done [#allocation6], 16
    $region21: #{tpu_custom_call.1} parent=1 // pred_fallthru
      _
    %v43 = vld [vmem:[#allocation2] sm:$0x1]
    %v44 = vld [vmem:[#allocation5] sm:$0x1]
    %v45 = vadd.f32 %v43, %v44
    %v46 = vld [vmem:[%s2] sm:$0x1]
    %v47 = vadd.f32 %v45, %v46
    %vm48 = vcmask 57344
    %49 = vst.msk [vmem:[#allocation7] sm:$0x1] %vm48, %v47
    // Predicated region
    $region22: #{tpu_custom_call.1} parent=1 // pred_check
      _
    $region23: #{tpu_custom_call.1} parent=1 // pred_check_branch
      %51 = sbr.rel (0) target = $region25
    $region24: #{tpu_custom_call.1} parent=1 // pred_region
      %53 = vsyncadd [#allocation4], 0
      %s55 = sshll.u32 [#allocation7], 4
      %s56 = int_to_ptr.vmem [resolvable:$true] %s55
      %s57 = sshll.u32 %s3, 4
      %s58 = int_to_ptr.hbm [resolvable:$true] %s57
      %60 = dma.vmem_to_hbm [thread:$0]  %s56, 16, %s58, [#allocation4]
    $region25: #{tpu_custom_call.1} parent=1 // pred_fallthru
      _
    // Predicated region
    $region26: #{tpu_custom_call.1} parent=1 // pred_check
      _
    $region27: #{tpu_custom_call.1} parent=1 // pred_check_branch
      %62 = sbr.rel (0) target = $region29
    $region28: #{tpu_custom_call.1} parent=1 // pred_region
      %64 = dma.done [#allocation4], 16
    $region29: #{tpu_custom_call.1} parent=1 // pred_fallthru
      _
    %65 = vsyncpa [#allocation3], 1
    %66 = vsyncpa [#allocation6], 1
    %67 = vsyncpa [#allocation4], 1

</llo_original>
